<compile_context>
chip_gen: v7x
topology: tpu7x:2x2x1
jax: 0.10.0
libtpu: 0.0.40
codegen_flags: <defaults>
</compile_context>

<pallas_src>
import functools

import jax
import jax.numpy as jnp
from jax.experimental import pallas as pl
from jax.experimental.pallas import tpu as pltpu


_LANES = 128


def _kl_div_kernel(x_ref, t_ref, o_ref, *, tile_rows, valid_rows, blocks_per_core):
    c = pl.program_id(0)   # core / parallel axis
    j = pl.program_id(1)   # reduction axis ("arbitrary")

    # Zero this core's resident output row on its first reduction step.
    @pl.when(j == 0)
    def _():
        o_ref[...] = jnp.zeros_like(o_ref)

    # Logical row-block covered by this step. It may point past the real array
    # (ragged last tile, or the clamped duplicate tile of an odd core split);
    # those rows are masked out below so they contribute exactly zero.
    logical_block = c * blocks_per_core + j
    row_start = logical_block * tile_rows
    row_ids = row_start + jax.lax.broadcasted_iota(jnp.int32, (tile_rows, _LANES), 0)
    valid = row_ids < valid_rows

    # Sanitize masked elements BEFORE the logs (garbage in the OOB part of the
    # block could otherwise produce NaN/Inf): input -> 1.0, target -> 0.0.
    x = jnp.where(valid, x_ref[...].astype(jnp.float32), 1.0)
    t = jnp.where(valid, t_ref[...].astype(jnp.float32), 0.0)

    log_input = jnp.log(x + 1e-8)
    # xlogy semantics: zero contribution where target == 0 (single select).
    pointwise = jnp.where(t > 0.0, t * (jnp.log(t) - log_input), 0.0)

    # Per-lane partial sums only (sublane reduce); the cross-lane reduce and the
    # 'batchmean' division happen once in the wrapper.
    o_ref[...] += jnp.sum(pointwise, axis=0, keepdims=True)


def kl_div_loss(inp, target, *, tile_rows=8192):
    """KLDivLoss(reduction='batchmean') of (non-log) `inp` vs `target`.

    Accepts arbitrary-rank inputs (e.g. NCHW); batch dim is axis 0.
    Returns a float32 scalar.
    """
    assert inp.shape == target.shape
    b = inp.shape[0]
    n = 1
    for d in inp.shape:
        n *= d

    x = inp.reshape(-1)
    t = target.reshape(-1)

    # Make the flat buffer reshapeable to (rows, 128). This pad only triggers in
    # the rare case total element count % 128 != 0, and only adds < 128 elements
    # (target = 0 -> zero contribution; input = 1 keeps log finite).
    rem = n % _LANES
    if rem:
        pad = _LANES - rem
        x = jnp.concatenate([x, jnp.ones((pad,), x.dtype)])
        t = jnp.concatenate([t, jnp.zeros((pad,), t.dtype)])
        n += pad
    rows = n // _LANES

    x2 = x.reshape(rows, _LANES)
    t2 = t.reshape(rows, _LANES)

    # Row-tile: (tr, 128) f32 = tr * 512 bytes per input per grid step.
    tile_rows = max(8, (tile_rows // 8) * 8)   # keep block rows a multiple of 8
    if rows <= tile_rows:
        tr = rows                              # single block spanning the full row extent
    else:
        tr = tile_rows
    num_blocks = pl.cdiv(rows, tr)

    # Split the reduction across (up to) two TensorCores (v7x megacore); one
    # partial-sum output row per core, combined in the wrapper.
    num_cores = 2 if num_blocks >= 2 else 1
    blocks_per_core = pl.cdiv(num_blocks, num_cores)

    def in_index(c, j):
        # Clamp so the rectangular grid never DMAs past the array; clamped
        # duplicate blocks are fully masked inside the kernel.
        blk = jnp.minimum(c * blocks_per_core + j, num_blocks - 1)
        return (blk, 0)

    out = pl.pallas_call(
        functools.partial(
            _kl_div_kernel,
            tile_rows=tr,
            valid_rows=rows,
            blocks_per_core=blocks_per_core,
        ),
        out_shape=jax.ShapeDtypeStruct((num_cores, _LANES), jnp.float32),
        grid_spec=pltpu.PrefetchScalarGridSpec(
            num_scalar_prefetch=0,
            grid=(num_cores, blocks_per_core),
            in_specs=[
                pl.BlockSpec((tr, _LANES), in_index),
                pl.BlockSpec((tr, _LANES), in_index),
            ],
            out_specs=pl.BlockSpec((1, _LANES), lambda c, j: (c, 0)),
        ),
        compiler_params=pltpu.CompilerParams(
            dimension_semantics=("parallel", "arbitrary"),
            vmem_limit_bytes=40 * 1024 * 1024,
        ),
    )(x2, t2)

    # Final (tiny) cross-lane / cross-core reduce + 'batchmean' division.
    return jnp.sum(out) / jnp.float32(b)


def _reference(inp, target):
    # Pure-JAX reference of torch KLDivLoss(reduction='batchmean') on log(inp + 1e-8).
    log_input = jnp.log(inp.astype(jnp.float32) + 1e-8)
    t = target.astype(jnp.float32)
    t_log_t = jnp.where(t > 0.0, t * jnp.log(jnp.where(t > 0.0, t, 1.0)), 0.0)
    return jnp.sum(t_log_t - t * log_input) / inp.shape[0]


if __name__ == "__main__":
    key = jax.random.PRNGKey(0)
    k1, k2 = jax.random.split(key)

    B, C, H, W = 2, 4, 16, 16  # NCHW, like the PyTorch module's typical input

    # Build valid probability distributions over the (C, H, W) elements per batch.
    logits_in = jax.random.normal(k1, (B, C, H, W), dtype=jnp.float32)
    logits_tg = jax.random.normal(k2, (B, C, H, W), dtype=jnp.float32)
    inp = jax.nn.softmax(logits_in.reshape(B, -1), axis=-1).reshape(B, C, H, W)
    tgt = jax.nn.softmax(logits_tg.reshape(B, -1), axis=-1).reshape(B, C, H, W)

    loss = jax.block_until_ready(kl_div_loss(inp, tgt))
    ref = jax.block_until_ready(_reference(inp, tgt))

    assert jnp.allclose(loss, ref, rtol=1e-5, atol=1e-6), (loss, ref)

    print("KERNEL_OK")
</pallas_src>

<mosaic_0001>
module attributes {stable_mosaic.version = 11 : i64} {
  func.func @_kl_div_kernel(%arg0: i32, %arg1: i32, %arg2: memref<16x128xf32, #tpu.memory_space<vmem>>, %arg3: memref<16x128xf32, #tpu.memory_space<vmem>>, %arg4: memref<1x128xf32, #tpu.memory_space<vmem>>) attributes {dimension_semantics = [#tpu.dimension_semantics<parallel>, #tpu.dimension_semantics<arbitrary>], iteration_bounds = array<i64: 1, 1>, scalar_prefetch = 0 : i64, scratch_operands = 0 : i64, tpu.core_type = #tpu.core_type<tc>, window_params = [{transform_indices = @transform_0, window_bounds = array<i64: 16, 128>}, {transform_indices = @transform_1, window_bounds = array<i64: 16, 128>}, {transform_indices = @transform_2, window_bounds = array<i64: 1, 128>}]} {
    %c0_i32 = arith.constant 0 : i32
    %0 = arith.cmpi eq, %arg1, %c0_i32 : i32
    %1 = arith.extui %0 : i1 to i32
    %c0_i32_0 = arith.constant 0 : i32
    %2 = arith.cmpi ne, %1, %c0_i32_0 : i32
    scf.if %2 {
      %cst_14 = arith.constant 0.000000e+00 : f32
      %32 = vector.broadcast %cst_14 : f32 to vector<1x128xf32>
      %c0_15 = arith.constant 0 : index
      %c0_16 = arith.constant 0 : index
      %33 = vector.load %arg4[%c0_15, %c0_16] : memref<1x128xf32, #tpu.memory_space<vmem>>, vector<1x128xf32>
      tpu.vector_store %arg4[%c0_15, %c0_16], %32 {strides = array<i32>} : memref<1x128xf32, #tpu.memory_space<vmem>>, vector<1x128xf32>,
    } else {
    }
    %c1_i32 = arith.constant 1 : i32
    %3 = arith.muli %arg0, %c1_i32 : i32
    %4 = arith.addi %3, %arg1 : i32
    %c16_i32 = arith.constant 16 : i32
    %5 = arith.muli %4, %c16_i32 : i32
    %6 = tpu.iota {dimensions = array<i32: 0>} : vector<16x128xi32>
    %7 = vector.broadcast %5 : i32 to vector<16x128xi32>
    %8 = arith.addi %7, %6 : vector<16x128xi32>
    %c16_i32_1 = arith.constant 16 : i32
    %9 = vector.broadcast %c16_i32_1 : i32 to vector<16x128xi32>
    %10 = arith.cmpi slt, %8, %9 : vector<16x128xi32>
    %c0 = arith.constant 0 : index
    %c0_2 = arith.constant 0 : index
    %11 = vector.load %arg2[%c0, %c0_2] : memref<16x128xf32, #tpu.memory_space<vmem>>, vector<16x128xf32>
    %cst = arith.constant 1.000000e+00 : f32
    %12 = vector.broadcast %cst : f32 to vector<16x128xf32>
    %13 = arith.select %10, %11, %12 : vector<16x128xi1>, vector<16x128xf32>
    %c0_3 = arith.constant 0 : index
    %c0_4 = arith.constant 0 : index
    %14 = vector.load %arg3[%c0_3, %c0_4] : memref<16x128xf32, #tpu.memory_space<vmem>>, vector<16x128xf32>
    %cst_5 = arith.constant 0.000000e+00 : f32
    %15 = vector.broadcast %cst_5 : f32 to vector<16x128xf32>
    %16 = arith.select %10, %14, %15 : vector<16x128xi1>, vector<16x128xf32>
    %cst_6 = arith.constant 9.99999993E-9 : f32
    %17 = vector.broadcast %cst_6 : f32 to vector<16x128xf32>
    %18 = arith.addf %13, %17 : vector<16x128xf32>
    %19 = math.log %18 : vector<16x128xf32>
    %cst_7 = arith.constant 0.000000e+00 : f32
    %20 = vector.broadcast %cst_7 : f32 to vector<16x128xf32>
    %21 = arith.cmpf ogt, %16, %20 : vector<16x128xf32>
    %22 = math.log %16 : vector<16x128xf32>
    %23 = arith.subf %22, %19 : vector<16x128xf32>
    %24 = arith.mulf %16, %23 : vector<16x128xf32>
    %cst_8 = arith.constant 0.000000e+00 : f32
    %25 = vector.broadcast %cst_8 : f32 to vector<16x128xf32>
    %26 = arith.select %21, %24, %25 : vector<16x128xi1>, vector<16x128xf32>
    %c0_9 = arith.constant 0 : index
    %c0_10 = arith.constant 0 : index
    %27 = vector.load %arg4[%c0_9, %c0_10] : memref<1x128xf32, #tpu.memory_space<vmem>>, vector<1x128xf32>
    %cst_11 = arith.constant dense<0.000000e+00> : vector<128xf32>
    %28 = vector.multi_reduction <add>, %26, %cst_11 [0] : vector<16x128xf32> to vector<128xf32>
    %29 = vector.shape_cast %28 : vector<128xf32> to vector<1x128xf32>
    %30 = arith.addf %27, %29 : vector<1x128xf32>
    %c0_12 = arith.constant 0 : index
    %c0_13 = arith.constant 0 : index
    %31 = vector.load %arg4[%c0_12, %c0_13] : memref<1x128xf32, #tpu.memory_space<vmem>>, vector<1x128xf32>
    tpu.vector_store %arg4[%c0_12, %c0_13], %30 {strides = array<i32>} : memref<1x128xf32, #tpu.memory_space<vmem>>, vector<1x128xf32>,
    return
  }
  func.func @transform_0(%arg0: i32, %arg1: i32) -> (i32, i32) {
    %c1_i32 = arith.constant 1 : i32
    %0 = arith.muli %arg0, %c1_i32 : i32
    %1 = arith.addi %0, %arg1 : i32
    %c0_i32 = arith.constant 0 : i32
    %2 = arith.minsi %1, %c0_i32 : i32
    %c0_i32_0 = arith.constant 0 : i32
    %c0_i32_1 = arith.constant 0 : i32
    return %2, %c0_i32_0 : i32, i32
  }
  func.func @transform_1(%arg0: i32, %arg1: i32) -> (i32, i32) {
    %c1_i32 = arith.constant 1 : i32
    %0 = arith.muli %arg0, %c1_i32 : i32
    %1 = arith.addi %0, %arg1 : i32
    %c0_i32 = arith.constant 0 : i32
    %2 = arith.minsi %1, %c0_i32 : i32
    %c0_i32_0 = arith.constant 0 : i32
    %c0_i32_1 = arith.constant 0 : i32
    return %2, %c0_i32_0 : i32, i32
  }
  func.func @transform_2(%arg0: i32, %arg1: i32) -> (i32, i32) {
    %c0_i32 = arith.constant 0 : i32
    %c0_i32_0 = arith.constant 0 : i32
    return %arg0, %c0_i32 : i32, i32
  }
}

</mosaic_0001>

<llo_original>
// kernel: tpu_custom_call.1
$region0: #{tpu_custom_call.1}
  #allocation0 [shape = 'u32[]', space=smem, size = 0x4, offset = 0x4, fixed_abs, tag = 'smem constant byte address 0x4 - core index']
  #allocation1 [shape = 'u32[144,128]{1,0:T(1,128)}', space=vmem, size = 0x12000, scoped, tag = 'internal scratch']
  %s0 = inlined_call_operand.hbm [shape: f32[16,128], index: 0, kind: input, shape index: {}]
  %s1 = inlined_call_operand.hbm [shape: f32[16,128], index: 1, kind: input, shape index: {}]
  %s2 = inlined_call_operand.hbm [shape: f32[1,128], index: 2, kind: output, shape index: {}]
  %s3 = sld [smem:[#allocation0]]
  $region30: #{tpu_custom_call.1} parent=0
    _
  %s5 = ssub.s32 1, %s3
  %s6 = scalar_select 0, %s5, %s3
  $region1: #{tpu_custom_call.1} parent=0
    #allocation2 [shape = 'u8[8192]{0}', space=vmem, size = 0x2000, scoped, tag = 'input window, operand 0, single buffered']
    #allocation3 [shape = 's32[1]{0}', space=sflag, size = 0x4, scoped, tag = 'scoped memory for tpu_custom_call.1']
    #allocation4 [shape = 's32[1]{0}', space=sflag, size = 0x4, scoped, tag = 'scoped memory for tpu_custom_call.1']
    #allocation5 [shape = 'u8[8192]{0}', space=vmem, size = 0x2000, scoped, tag = 'input window, operand 1, single buffered']
    #allocation6 [shape = 's32[1]{0}', space=sflag, size = 0x4, scoped, tag = 'scoped memory for tpu_custom_call.1']
    #allocation7 [shape = 'u8[512]{0}', space=vmem, size = 0x400, scoped, tag = 'output window, operand 0, single buffered']
    %7 = vsyncpa [#allocation3], 0
    %8 = vsyncpa [#allocation6], 0
    %9 = vsyncpa [#allocation4], 0
    // Predicated region
    $region2: #{tpu_custom_call.1} parent=1 // pred_check
      _
    $region3: #{tpu_custom_call.1} parent=1 // pred_check_branch
      %11 = sbr.rel (0) target = $region5
    $region4: #{tpu_custom_call.1} parent=1 // pred_region
      %s12 = sadd.s32 0, 0
      %p13 = scmp.lt.s32.totalorder %s12, 0
      %s14 = scalar_select %p13, %s12, 0
      %s15 = smul.u32 2, %s14
      %s17 = ssub.s32 256, 256
      %18 = vsyncadd [#allocation3], %s17
      %s19 = smul.addr %s15, 128
      %s20 = scalar_lea.hbm %s0, %s19
      %s21 = sshll.u32 [#allocation2], 4
      %s22 = int_to_ptr.vmem [resolvable:$true] %s21
      %27 = dma.hbm_to_vmem [thread:$0]  %s20, 256, %s22, [#allocation3], 128, 128, 8
    $region5: #{tpu_custom_call.1} parent=1 // pred_fallthru
      _
    // Predicated region
    $region6: #{tpu_custom_call.1} parent=1 // pred_check
      _
    $region7: #{tpu_custom_call.1} parent=1 // pred_check_branch
      %29 = sbr.rel (0) target = $region9
    $region8: #{tpu_custom_call.1} parent=1 // pred_region
      %s30 = sadd.s32 0, 0
      %p31 = scmp.lt.s32.totalorder %s30, 0
      %s32 = scalar_select %p31, %s30, 0
      %s33 = smul.u32 2, %s32
      %s35 = ssub.s32 256, 256
      %36 = vsyncadd [#allocation6], %s35
      %s37 = smul.addr %s33, 128
      %s38 = scalar_lea.hbm %s1, %s37
      %s39 = sshll.u32 [#allocation5], 4
      %s40 = int_to_ptr.vmem [resolvable:$true] %s39
      %45 = dma.hbm_to_vmem [thread:$0]  %s38, 256, %s40, [#allocation6], 128, 128, 8
    $region9: #{tpu_custom_call.1} parent=1 // pred_fallthru
      _
    // Predicated region
    $region10: #{tpu_custom_call.1} parent=1 // pred_check
      _
    $region11: #{tpu_custom_call.1} parent=1 // pred_check_branch
      %47 = sbr.rel (0) target = $region13
    $region12: #{tpu_custom_call.1} parent=1 // pred_region
      %48 = dma.done [#allocation3], 256
    $region13: #{tpu_custom_call.1} parent=1 // pred_fallthru
      _
    // Predicated region
    $region14: #{tpu_custom_call.1} parent=1 // pred_check
      _
    $region15: #{tpu_custom_call.1} parent=1 // pred_check_branch
      %50 = sbr.rel (0) target = $region17
    $region16: #{tpu_custom_call.1} parent=1 // pred_region
      %51 = dma.done [#allocation6], 256
    $region17: #{tpu_custom_call.1} parent=1 // pred_fallthru
      _
    %s52 = sadd.s32 0, 0
    %p53 = scmp.lt.s32.totalorder %s52, 0
    %s54 = scalar_select %p53, %s52, 0
    %s55 = smul.u32 2, %s54
    %s56 = sadd.s32 0, 0
    %p57 = scmp.lt.s32.totalorder %s56, 0
    %s58 = scalar_select %p57, %s56, 0
    %s59 = smul.u32 2, %s58
    %p60 = scmp.eq.s32.totalorder 0, 0
    // Predicated region
    $region18: #{tpu_custom_call.1} parent=1 // pred_check
      %p61 = pneg %p60
    $region19: #{tpu_custom_call.1} parent=1 // pred_check_branch
      %63 = sbr.rel (%p61) target = $region21
    $region20: #{tpu_custom_call.1} parent=1 // pred_region
      %64 = vst [vmem:[#allocation7] sm:$0x1] 0.0
    $region21: #{tpu_custom_call.1} parent=1 // pred_fallthru
      _
    %s65 = sadd.s32 0, 0
    %s66 = smul.u32 %s65, 16
    %v67 = vlaneseq
    %v68 = vshrl.u32 %v67, 7
    %v69 = vadd.s32 %v68, 8
    %v70 = vstv %s66
    %v71 = vadd.s32 %v70, %v68
    %v72 = vadd.s32 %v70, %v69
    %vm73 = vcmp.lt.s32.totalorder %v71, 16
    %vm74 = vcmp.lt.s32.totalorder %v72, 16
    %v75 = vld [vmem:[#allocation2] sm:$0xff]
    %v76 = vld [vmem:[#allocation2 + $0x8] sm:$0xff]
    %v77 = vsel %vm73, %v75, 1.0
    %v78 = vsel %vm74, %v76, 1.0
    %v79 = vld [vmem:[#allocation5] sm:$0xff]
    %v80 = vld [vmem:[#allocation5 + $0x8] sm:$0xff]
    %v81 = vsel %vm73, %v79, 0.0
    %v82 = vsel %vm74, %v80, 0.0
    %v83 = vadd.f32 %v77, 1e-08
    %v84 = vadd.f32 %v78, 1e-08
    %v85 = vlog2.pop %v83
    %v86 = vmul.f32 %v85, 0.6931472
    %v87 = vlog2.pop %v84
    %v88 = vmul.f32 %v87, 0.6931472
    %vm89 = vcmp.gt.f32.partialorder %v81, 0.0
    %vm90 = vcmp.gt.f32.partialorder %v82, 0.0
    %v91 = vlog2.pop %v81
    %v92 = vmul.f32 %v91, 0.6931472
    %v93 = vlog2.pop %v82
    %v94 = vmul.f32 %v93, 0.6931472
    %v95 = vsub.f32 %v92, %v86
    %v96 = vsub.f32 %v94, %v88
    %v97 = vmul.f32 %v81, %v95
    %v98 = vmul.f32 %v82, %v96
    %v99 = vsel %vm89, %v97, 0.0
    %v100 = vsel %vm90, %v98, 0.0
    %v101 = vld [vmem:[#allocation7] sm:$0x1]
    %v102 = vadd.f32 %v99, %v100
    %v103 = vrot.slane %v102, 4
    %v104 = vadd.f32 %v102, %v103
    %v105 = vrot.slane %v104, 2
    %v106 = vadd.f32 %v104, %v105
    %v107 = vrot.slane %v106, 1
    %v108 = vadd.f32 %v106, %v107
    %v109 = vadd.f32 %v101, %v108
    %110 = vst [vmem:[#allocation7] sm:$0x1] %v109
    // Predicated region
    $region22: #{tpu_custom_call.1} parent=1 // pred_check
      _
    $region23: #{tpu_custom_call.1} parent=1 // pred_check_branch
      %112 = sbr.rel (0) target = $region25
    $region24: #{tpu_custom_call.1} parent=1 // pred_region
      %s114 = ssub.s32 16, 16
      %115 = vsyncadd [#allocation4], %s114
      %s117 = sshll.u32 [#allocation7], 4
      %s118 = int_to_ptr.vmem [resolvable:$true] %s117
      %120 = dma.vmem_to_hbm [thread:$0]  %s118, 16, %s2, [#allocation4]
    $region25: #{tpu_custom_call.1} parent=1 // pred_fallthru
      _
    // Predicated region
    $region26: #{tpu_custom_call.1} parent=1 // pred_check
      _
    $region27: #{tpu_custom_call.1} parent=1 // pred_check_branch
      %122 = sbr.rel (0) target = $region29
    $region28: #{tpu_custom_call.1} parent=1 // pred_region
      %123 = dma.done [#allocation4], 16
    $region29: #{tpu_custom_call.1} parent=1 // pred_fallthru
      _
    %124 = vsyncpa [#allocation3], 1
    %125 = vsyncpa [#allocation6], 1
    %126 = vsyncpa [#allocation4], 1

</llo_original>
